<compile_context>
chip_gen: v7x
topology: tpu7x:2x2x1
jax: 0.10.0
libtpu: 0.0.40
codegen_flags: <defaults>
</compile_context>

<pallas_src>
import math

import jax
import jax.numpy as jnp
from jax.experimental import pallas as pl
from jax.experimental.pallas import tpu as pltpu


def _sigmoid(z):
    # sigmoid(z) == 0.5 * tanh(0.5 * z) + 0.5  (exact identity):
    # one EUP op (tanh) + cheap VPU mul/add instead of exp + divide.
    return 0.5 * jnp.tanh(0.5 * z) + 0.5


def _pick_tile(dim, candidates):
    for c in candidates:
        if c <= dim and dim % c == 0:
            return c
    return dim  # full extent is always a legal block size


# ---------------------------------------------------------------------------
# Single-step kernel.
# Grid = (batch tiles, H tiles).  One fused matmul per grid point:
#   [tb, I+H] @ [I+H, 4*th]  ->  gates for H-slice `hi`, columns [i|f|c|o].
# ---------------------------------------------------------------------------
def _lstm_step_kernel(xh_ref, c0_ref, w_ref, b_ref, h1_ref, c1_ref):
    th = c0_ref.shape[1]

    gates = jnp.dot(xh_ref[...], w_ref[...], preferred_element_type=jnp.float32)
    gates = gates + b_ref[...]  # (tb, 4*th) + (1, 4*th)

    gate_i = _sigmoid(gates[:, 0 * th:1 * th])
    gate_f = _sigmoid(gates[:, 1 * th:2 * th])
    gate_c = jnp.tanh(gates[:, 2 * th:3 * th])
    gate_o = _sigmoid(gates[:, 3 * th:4 * th])

    c1 = gate_f * c0_ref[...].astype(jnp.float32) + gate_i * gate_c
    h1 = gate_o * jnp.tanh(c1)

    c1_ref[...] = c1.astype(c1_ref.dtype)
    h1_ref[...] = h1.astype(h1_ref.dtype)


def prepare_lstm_params(w_ih, w_hh, b_ih, b_hh, *, tile_h=None, matmul_dtype=None):
    """One-time weight packing (call ONCE, outside any time loop).

    w_ih: [4H, I], w_hh: [4H, H], b_ih/b_hh: [4H].
    Returns (w_packed [I+H, 4H], b_packed [1, 4H] f32, tile_h).
    Gate columns are reordered so H-tile j owns contiguous [i|f|c|o] columns.
    """
    H4, I = w_ih.shape
    H = H4 // 4
    if tile_h is None:
        tile_h = _pick_tile(H, (512, 256, 128))
    n_h = H // tile_h
    K = I + H

    # Stack the two weight matrices -> one [I+H, 4H] operand; fuse the biases.
    w = jnp.concatenate([w_ih, w_hh], axis=1).T            # [I+H, 4H]
    b = (b_ih + b_hh).astype(jnp.float32)                  # [4H]

    # Reorder gate columns: (gate g, h-tile j, offset r) -> (j, g, r).
    w = w.reshape(K, 4, n_h, tile_h).transpose(0, 2, 1, 3).reshape(K, 4 * H)
    b = b.reshape(4, n_h, tile_h).transpose(1, 0, 2).reshape(1, 4 * H)

    if matmul_dtype is not None:
        w = w.astype(matmul_dtype)
    return w, b, tile_h


def lstm_cell_tied_step(x, h0, c0, w_packed, b_packed, tile_h, *,
                        matmul_dtype=None, tile_b=None):
    """One LSTM step using pre-packed weights from prepare_lstm_params()."""
    B, I = x.shape
    H = h0.shape[1]
    K = I + H

    xh = jnp.concatenate([x, h0], axis=1)                  # [B, I+H]
    if matmul_dtype is not None:
        xh = xh.astype(matmul_dtype)

    if tile_b is None:
        tile_b = _pick_tile(B, (256, 128, 64, 32, 16, 8))
    grid = (B // tile_b, H // tile_h)

    # VMEM budget: double-buffered input/weight/output blocks + f32 gates.
    in_bytes = xh.dtype.itemsize
    w_bytes = w_packed.dtype.itemsize
    est = 2 * (tile_b * K * in_bytes
               + K * 4 * tile_h * w_bytes
               + 4 * tile_h * 4
               + tile_b * tile_h * c0.dtype.itemsize
               + 2 * tile_b * tile_h * h0.dtype.itemsize)
    est += tile_b * 4 * tile_h * 4
    vmem_limit = int(min(64 * 2**20, max(32 * 2**20, 2 * est)))

    h1, c1 = pl.pallas_call(
        _lstm_step_kernel,
        out_shape=(
            jax.ShapeDtypeStruct((B, H), h0.dtype),
            jax.ShapeDtypeStruct((B, H), c0.dtype),
        ),
        grid_spec=pltpu.PrefetchScalarGridSpec(
            num_scalar_prefetch=0,
            grid=grid,
            in_specs=[
                pl.BlockSpec((tile_b, K), lambda bi, hi: (bi, 0)),
                pl.BlockSpec((tile_b, tile_h), lambda bi, hi: (bi, hi)),
                pl.BlockSpec((K, 4 * tile_h), lambda bi, hi: (0, hi)),
                pl.BlockSpec((1, 4 * tile_h), lambda bi, hi: (0, hi)),
            ],
            out_specs=(
                pl.BlockSpec((tile_b, tile_h), lambda bi, hi: (bi, hi)),
                pl.BlockSpec((tile_b, tile_h), lambda bi, hi: (bi, hi)),
            ),
        ),
        compiler_params=pltpu.CompilerParams(
            dimension_semantics=("parallel", "parallel"),
            vmem_limit_bytes=vmem_limit),
    )(xh, c0, w_packed, b_packed)
    return h1, c1


def lstm_cell_tied(x, h0, c0, w_ih, w_hh, b_ih, b_hh, *, matmul_dtype=None):
    """Convenience single-call API mirroring LSTMcell_tied.forward (eval path).

    When stepping over time, call prepare_lstm_params() once and
    lstm_cell_tied_step() per step — or better, use lstm_sequence_tied().
    """
    w_p, b_p, th = prepare_lstm_params(w_ih, w_hh, b_ih, b_hh,
                                       matmul_dtype=matmul_dtype)
    return lstm_cell_tied_step(x, h0, c0, w_p, b_p, th, matmul_dtype=matmul_dtype)


# ---------------------------------------------------------------------------
# Sequence-fused kernel: grid=(T,), weights/bias VMEM-resident (constant
# index_map), h/c carried in VMEM scratch, x streamed one timestep per step.
# ---------------------------------------------------------------------------
def _lstm_seq_kernel(x_ref, h0_ref, c0_ref, wih_ref, whh_ref, b_ref,
                     hseq_ref, clast_ref, h_sc, c_sc):
    t = pl.program_id(0)

    @pl.when(t == 0)
    def _():
        h_sc[...] = h0_ref[...].astype(jnp.float32)
        c_sc[...] = c0_ref[...].astype(jnp.float32)

    H = h0_ref.shape[1]
    mm_dtype = wih_ref.dtype

    gates = jnp.dot(x_ref[0].astype(mm_dtype), wih_ref[...],
                    preferred_element_type=jnp.float32)
    gates = gates + jnp.dot(h_sc[...].astype(mm_dtype), whh_ref[...],
                            preferred_element_type=jnp.float32)
    gates = gates + b_ref[...]

    gate_i = _sigmoid(gates[:, 0 * H:1 * H])
    gate_f = _sigmoid(gates[:, 1 * H:2 * H])
    gate_c = jnp.tanh(gates[:, 2 * H:3 * H])
    gate_o = _sigmoid(gates[:, 3 * H:4 * H])

    c1 = gate_f * c_sc[...] + gate_i * gate_c
    h1 = gate_o * jnp.tanh(c1)

    h_sc[...] = h1
    c_sc[...] = c1
    hseq_ref[0] = h1.astype(hseq_ref.dtype)
    clast_ref[...] = c1.astype(clast_ref.dtype)


def lstm_sequence_tied(x_seq, h0, c0, w_ih, w_hh, b_ih, b_hh, *, matmul_dtype=None):
    """Run T LSTM steps in one pallas_call. Returns (h_seq [T,B,H], c_last [B,H])."""
    T, B, I = x_seq.shape
    H = h0.shape[1]

    w_ih_t = jnp.transpose(w_ih)                 # [I, 4H]
    w_hh_t = jnp.transpose(w_hh)                 # [H, 4H]
    b = (b_ih + b_hh).astype(jnp.float32).reshape(1, 4 * H)
    if matmul_dtype is not None:
        w_ih_t = w_ih_t.astype(matmul_dtype)
        w_hh_t = w_hh_t.astype(matmul_dtype)
        x_seq = x_seq.astype(matmul_dtype)

    w_bytes = w_ih_t.dtype.itemsize
    est = (2 * (I + H) * 4 * H * w_bytes            # resident weights (x2 buf)
           + 2 * B * I * x_seq.dtype.itemsize       # streamed x block
           + 4 * B * H * 4                          # h0/c0 blocks
           + 2 * 4 * H * 4                          # bias
           + 4 * B * H * h0.dtype.itemsize          # outputs
           + 2 * B * H * 4                          # scratch
           + B * 4 * H * 4)                         # gates
    vmem_limit = int(min(64 * 2**20, max(32 * 2**20, 2 * est)))

    h_seq, c_last = pl.pallas_call(
        _lstm_seq_kernel,
        out_shape=(
            jax.ShapeDtypeStruct((T, B, H), h0.dtype),
            jax.ShapeDtypeStruct((B, H), c0.dtype),
        ),
        grid_spec=pltpu.PrefetchScalarGridSpec(
            num_scalar_prefetch=0,
            grid=(T,),
            in_specs=[
                pl.BlockSpec((1, B, I), lambda t: (t, 0, 0)),
                pl.BlockSpec((B, H), lambda t: (0, 0)),
                pl.BlockSpec((B, H), lambda t: (0, 0)),
                pl.BlockSpec((I, 4 * H), lambda t: (0, 0)),
                pl.BlockSpec((H, 4 * H), lambda t: (0, 0)),
                pl.BlockSpec((1, 4 * H), lambda t: (0, 0)),
            ],
            out_specs=(
                pl.BlockSpec((1, B, H), lambda t: (t, 0, 0)),
                pl.BlockSpec((B, H), lambda t: (0, 0)),
            ),
            scratch_shapes=[pltpu.VMEM((B, H), jnp.float32),
                            pltpu.VMEM((B, H), jnp.float32)],
        ),
        compiler_params=pltpu.CompilerParams(
            dimension_semantics=("arbitrary",),
            vmem_limit_bytes=vmem_limit),
    )(x_seq, h0, c0, w_ih_t, w_hh_t, b)
    return h_seq, c_last


# ---------------------------------------------------------------------------
# Pure-JAX reference (matches the PyTorch module's eval-path math exactly).
# ---------------------------------------------------------------------------
def _reference_step(x, h0, c0, w_ih, w_hh, b_ih, b_hh):
    gates = x @ w_ih.T + b_ih + h0 @ w_hh.T + b_hh
    H = h0.shape[1]
    gi = jax.nn.sigmoid(gates[:, 0:H])
    gf = jax.nn.sigmoid(gates[:, H:2 * H])
    gc = jnp.tanh(gates[:, 2 * H:3 * H])
    go = jax.nn.sigmoid(gates[:, 3 * H:4 * H])
    c1 = gf * c0 + gi * gc
    h1 = go * jnp.tanh(c1)
    return h1, c1


if __name__ == "__main__":
    key = jax.random.PRNGKey(0)

    def init_params(k, input_size, hidden):
        k1, k2, k3, k4 = jax.random.split(k, 4)
        stdv = 1.0 / math.sqrt(hidden)
        w_ih = jax.random.uniform(k1, (4 * hidden, input_size), jnp.float32, -stdv, stdv)
        w_hh = jax.random.uniform(k2, (4 * hidden, hidden), jnp.float32, -stdv, stdv)
        b_ih = jax.random.uniform(k3, (4 * hidden,), jnp.float32, -stdv, stdv)
        b_hh = jax.random.uniform(k4, (4 * hidden,), jnp.float32, -stdv, stdv)
        return w_ih, w_hh, b_ih, b_hh

    # ---- lane-aligned shapes (H multiple of 128) ----
    B, INPUT_SIZE, HIDDEN, T = 16, 64, 128, 8
    kp, kx, kh, kc, kxs, kp2, kx2, kh2, kc2 = jax.random.split(key, 9)
    w_ih, w_hh, b_ih, b_hh = init_params(kp, INPUT_SIZE, HIDDEN)
    x = jax.random.normal(kx, (B, INPUT_SIZE), jnp.float32)
    h0 = jax.random.normal(kh, (B, HIDDEN), jnp.float32)
    c0 = jax.random.normal(kc, (B, HIDDEN), jnp.float32)

    h1_ref, c1_ref = _reference_step(x, h0, c0, w_ih, w_hh, b_ih, b_hh)

    # 1) f32 single step (weights packed once, fused matmul, tiled grid).
    w_p, b_p, th = prepare_lstm_params(w_ih, w_hh, b_ih, b_hh)
    h1, c1 = lstm_cell_tied_step(x, h0, c0, w_p, b_p, th)
    jax.block_until_ready((h1, c1))
    assert jnp.allclose(h1, h1_ref, atol=2e-5, rtol=2e-5)
    assert jnp.allclose(c1, c1_ref, atol=2e-5, rtol=2e-5)

    # 2) bf16-operand / f32-accumulate step (v6e/v7x MXU fast path).
    w_pb, b_pb, thb = prepare_lstm_params(w_ih, w_hh, b_ih, b_hh,
                                          matmul_dtype=jnp.bfloat16)
    h1b, c1b = lstm_cell_tied_step(x, h0, c0, w_pb, b_pb, thb,
                                   matmul_dtype=jnp.bfloat16)
    jax.block_until_ready((h1b, c1b))
    assert jnp.allclose(h1b, h1_ref, atol=5e-2, rtol=5e-2)
    assert jnp.allclose(c1b, c1_ref, atol=5e-2, rtol=5e-2)

    # 3) sequence-fused kernel: weights stay VMEM-resident across T steps.
    x_seq = jax.random.normal(kxs, (T, B, INPUT_SIZE), jnp.float32)
    h_seq, c_last = lstm_sequence_tied(x_seq, h0, c0, w_ih, w_hh, b_ih, b_hh)
    jax.block_until_ready((h_seq, c_last))
    h_r, c_r = h0, c0
    hs_ref = []
    for t in range(T):
        h_r, c_r = _reference_step(x_seq[t], h_r, c_r, w_ih, w_hh, b_ih, b_hh)
        hs_ref.append(h_r)
    hs_ref = jnp.stack(hs_ref, 0)
    assert jnp.allclose(h_seq, hs_ref, atol=1e-4, rtol=1e-4)
    assert jnp.allclose(c_last, c_r, atol=1e-4, rtol=1e-4)

    # 4) tiny, non-lane-aligned module-scale shapes (full-extent block fallback).
    Bt, It, Ht = 8, 16, 32
    w_iht, w_hht, b_iht, b_hht = init_params(kp2, It, Ht)
    xt = jax.random.normal(kx2, (Bt, It), jnp.float32)
    h0t = jax.random.normal(kh2, (Bt, Ht), jnp.float32)
    c0t = jax.random.normal(kc2, (Bt, Ht), jnp.float32)
    h1t, c1t = lstm_cell_tied(xt, h0t, c0t, w_iht, w_hht, b_iht, b_hht)
    jax.block_until_ready((h1t, c1t))
    h1t_ref, c1t_ref = _reference_step(xt, h0t, c0t, w_iht, w_hht, b_iht, b_hht)
    assert jnp.allclose(h1t, h1t_ref, atol=2e-5, rtol=2e-5)
    assert jnp.allclose(c1t, c1t_ref, atol=2e-5, rtol=2e-5)

    print("KERNEL_OK")
</pallas_src>

<mosaic_0001>
module attributes {stable_mosaic.version = 11 : i64} {
  func.func @_lstm_step_kernel(%arg0: i32, %arg1: i32, %arg2: memref<16x192xf32, #tpu.memory_space<vmem>>, %arg3: memref<16x128xf32, #tpu.memory_space<vmem>>, %arg4: memref<192x512xf32, #tpu.memory_space<vmem>>, %arg5: memref<1x512xf32, #tpu.memory_space<vmem>>, %arg6: memref<16x128xf32, #tpu.memory_space<vmem>>, %arg7: memref<16x128xf32, #tpu.memory_space<vmem>>) attributes {dimension_semantics = [#tpu.dimension_semantics<parallel>, #tpu.dimension_semantics<parallel>], iteration_bounds = array<i64: 1, 1>, scalar_prefetch = 0 : i64, scratch_operands = 0 : i64, tpu.core_type = #tpu.core_type<tc>, window_params = [{transform_indices = @transform_0, window_bounds = array<i64: 16, 192>}, {transform_indices = @transform_1, window_bounds = array<i64: 16, 128>}, {transform_indices = @transform_2, window_bounds = array<i64: 192, 512>}, {transform_indices = @transform_3, window_bounds = array<i64: 1, 512>}, {transform_indices = @transform_4, window_bounds = array<i64: 16, 128>}, {transform_indices = @transform_5, window_bounds = array<i64: 16, 128>}]} {
    %c0 = arith.constant 0 : index
    %c0_0 = arith.constant 0 : index
    %0 = vector.load %arg2[%c0, %c0_0] : memref<16x192xf32, #tpu.memory_space<vmem>>, vector<16x192xf32>
    %c0_1 = arith.constant 0 : index
    %c0_2 = arith.constant 0 : index
    %1 = vector.load %arg4[%c0_1, %c0_2] : memref<192x512xf32, #tpu.memory_space<vmem>>, vector<192x512xf32>
    %cst = arith.constant dense<0.000000e+00> : vector<16x512xf32>
    %2 = tpu.matmul %0, %1, %cst {dimension_numbers = #tpu.dot_dimension_numbers<[1], [0], [0], [1], [0, 0, 1, 1], [], []>} : vector<16x192xf32>, vector<192x512xf32>, vector<16x512xf32> -> vector<16x512xf32>
    %c0_3 = arith.constant 0 : index
    %c0_4 = arith.constant 0 : index
    %3 = vector.load %arg5[%c0_3, %c0_4] : memref<1x512xf32, #tpu.memory_space<vmem>>, vector<1x512xf32>
    %4 = vector.broadcast %3 : vector<1x512xf32> to vector<16x512xf32>
    %5 = arith.addf %2, %4 : vector<16x512xf32>
    %6 = vector.extract_strided_slice %5 {offsets = [0, 0], sizes = [16, 128], strides = [1, 1]} : vector<16x512xf32> to vector<16x128xf32>
    %cst_5 = arith.constant 5.000000e-01 : f32
    %7 = vector.broadcast %cst_5 : f32 to vector<16x128xf32>
    %8 = arith.mulf %7, %6 : vector<16x128xf32>
    %9 = math.tanh %8 : vector<16x128xf32>
    %cst_6 = arith.constant 5.000000e-01 : f32
    %10 = vector.broadcast %cst_6 : f32 to vector<16x128xf32>
    %11 = arith.mulf %10, %9 : vector<16x128xf32>
    %cst_7 = arith.constant 5.000000e-01 : f32
    %12 = vector.broadcast %cst_7 : f32 to vector<16x128xf32>
    %13 = arith.addf %11, %12 : vector<16x128xf32>
    %14 = vector.extract_strided_slice %5 {offsets = [0, 128], sizes = [16, 128], strides = [1, 1]} : vector<16x512xf32> to vector<16x128xf32>
    %cst_8 = arith.constant 5.000000e-01 : f32
    %15 = vector.broadcast %cst_8 : f32 to vector<16x128xf32>
    %16 = arith.mulf %15, %14 : vector<16x128xf32>
    %17 = math.tanh %16 : vector<16x128xf32>
    %cst_9 = arith.constant 5.000000e-01 : f32
    %18 = vector.broadcast %cst_9 : f32 to vector<16x128xf32>
    %19 = arith.mulf %18, %17 : vector<16x128xf32>
    %cst_10 = arith.constant 5.000000e-01 : f32
    %20 = vector.broadcast %cst_10 : f32 to vector<16x128xf32>
    %21 = arith.addf %19, %20 : vector<16x128xf32>
    %22 = vector.extract_strided_slice %5 {offsets = [0, 256], sizes = [16, 128], strides = [1, 1]} : vector<16x512xf32> to vector<16x128xf32>
    %23 = math.tanh %22 : vector<16x128xf32>
    %24 = vector.extract_strided_slice %5 {offsets = [0, 384], sizes = [16, 128], strides = [1, 1]} : vector<16x512xf32> to vector<16x128xf32>
    %cst_11 = arith.constant 5.000000e-01 : f32
    %25 = vector.broadcast %cst_11 : f32 to vector<16x128xf32>
    %26 = arith.mulf %25, %24 : vector<16x128xf32>
    %27 = math.tanh %26 : vector<16x128xf32>
    %cst_12 = arith.constant 5.000000e-01 : f32
    %28 = vector.broadcast %cst_12 : f32 to vector<16x128xf32>
    %29 = arith.mulf %28, %27 : vector<16x128xf32>
    %cst_13 = arith.constant 5.000000e-01 : f32
    %30 = vector.broadcast %cst_13 : f32 to vector<16x128xf32>
    %31 = arith.addf %29, %30 : vector<16x128xf32>
    %c0_14 = arith.constant 0 : index
    %c0_15 = arith.constant 0 : index
    %32 = vector.load %arg3[%c0_14, %c0_15] : memref<16x128xf32, #tpu.memory_space<vmem>>, vector<16x128xf32>
    %33 = arith.mulf %21, %32 : vector<16x128xf32>
    %34 = arith.mulf %13, %23 : vector<16x128xf32>
    %35 = arith.addf %33, %34 : vector<16x128xf32>
    %36 = math.tanh %35 : vector<16x128xf32>
    %37 = arith.mulf %31, %36 : vector<16x128xf32>
    %c0_16 = arith.constant 0 : index
    %c0_17 = arith.constant 0 : index
    %38 = vector.load %arg7[%c0_16, %c0_17] : memref<16x128xf32, #tpu.memory_space<vmem>>, vector<16x128xf32>
    tpu.vector_store %arg7[%c0_16, %c0_17], %35 {strides = array<i32>} : memref<16x128xf32, #tpu.memory_space<vmem>>, vector<16x128xf32>,
    %c0_18 = arith.constant 0 : index
    %c0_19 = arith.constant 0 : index
    %39 = vector.load %arg6[%c0_18, %c0_19] : memref<16x128xf32, #tpu.memory_space<vmem>>, vector<16x128xf32>
    tpu.vector_store %arg6[%c0_18, %c0_19], %37 {strides = array<i32>} : memref<16x128xf32, #tpu.memory_space<vmem>>, vector<16x128xf32>,
    return
  }
  func.func @transform_0(%arg0: i32, %arg1: i32) -> (i32, i32) {
    %c0_i32 = arith.constant 0 : i32
    %c0_i32_0 = arith.constant 0 : i32
    return %arg0, %c0_i32 : i32, i32
  }
  func.func @transform_1(%arg0: i32, %arg1: i32) -> (i32, i32) {
    %c0_i32 = arith.constant 0 : i32
    return %arg0, %arg1 : i32, i32
  }
  func.func @transform_2(%arg0: i32, %arg1: i32) -> (i32, i32) {
    %c0_i32 = arith.constant 0 : i32
    %c0_i32_0 = arith.constant 0 : i32
    return %c0_i32, %arg1 : i32, i32
  }
  func.func @transform_3(%arg0: i32, %arg1: i32) -> (i32, i32) {
    %c0_i32 = arith.constant 0 : i32
    %c0_i32_0 = arith.constant 0 : i32
    return %c0_i32, %arg1 : i32, i32
  }
  func.func @transform_4(%arg0: i32, %arg1: i32) -> (i32, i32) {
    %c0_i32 = arith.constant 0 : i32
    return %arg0, %arg1 : i32, i32
  }
  func.func @transform_5(%arg0: i32, %arg1: i32) -> (i32, i32) {
    %c0_i32 = arith.constant 0 : i32
    return %arg0, %arg1 : i32, i32
  }
}

</mosaic_0001>

<llo_original>
// kernel: tpu_custom_call.1
$region0: #{tpu_custom_call.1}
  #allocation0 [shape = 'u32[]', space=smem, size = 0x4, offset = 0x4, fixed_abs, tag = 'smem constant byte address 0x4 - core index']
  #allocation1 [shape = 'u32[144,128]{1,0:T(1,128)}', space=vmem, size = 0x12000, scoped, tag = 'internal scratch']
  %s0 = inlined_call_operand.hbm [shape: f32[16,192], index: 0, kind: input, shape index: {}]
  %s1 = inlined_call_operand.hbm [shape: f32[16,128], index: 1, kind: input, shape index: {}]
  %s2 = inlined_call_operand.hbm [shape: f32[192,512], index: 2, kind: input, shape index: {}]
  %s3 = inlined_call_operand.vmem [shape: f32[1,512], index: 3, kind: input, shape index: {}]
  %s4 = inlined_call_operand.hbm [shape: f32[16,128], index: 4, kind: output, shape index: {0}]
  %s5 = inlined_call_operand.hbm [shape: f32[16,128], index: 5, kind: output, shape index: {1}]
  %6 = xla_tuple %s4, %s5
  %s7 = sld [smem:[#allocation0]]
  $region46: #{tpu_custom_call.1} parent=0
    _
  %s9 = ssub.s32 1, %s7
  %s10 = scalar_select 0, %s9, %s7
  $region1: #{tpu_custom_call.1} parent=0
    #allocation2 [shape = 'u8[16384]{0}', space=vmem, size = 0x4000, scoped, tag = 'input window, operand 0, single buffered']
    #allocation3 [shape = 's32[1]{0}', space=sflag, size = 0x4, scoped, tag = 'scoped memory for tpu_custom_call.1']
    #allocation4 [shape = 's32[1]{0}', space=sflag, size = 0x4, scoped, tag = 'scoped memory for tpu_custom_call.1']
    #allocation5 [shape = 'u8[8192]{0}', space=vmem, size = 0x2000, scoped, tag = 'input window, operand 1, single buffered']
    #allocation6 [shape = 's32[1]{0}', space=sflag, size = 0x4, scoped, tag = 'scoped memory for tpu_custom_call.1']
    #allocation7 [shape = 'u8[393216]{0}', space=vmem, size = 0x60000, scoped, tag = 'input window, operand 2, single buffered']
    #allocation8 [shape = 'u8[8192]{0}', space=vmem, size = 0x2000, scoped, tag = 'output window, operand 0, single buffered']
    #allocation9 [shape = 'u8[8192]{0}', space=vmem, size = 0x2000, scoped, tag = 'output window, operand 1, single buffered']
    #allocation10 [shape = 's32[1]{0}', space=sflag, size = 0x4, scoped, tag = 'scoped memory for tpu_custom_call.1']
    %11 = vsyncpa [#allocation3], 0
    %12 = vsyncpa [#allocation6], 0
    %13 = vsyncpa [#allocation4], 0
    %14 = vsyncpa [#allocation10], 0
    // Predicated region
    $region2: #{tpu_custom_call.1} parent=1 // pred_check
      _
    $region3: #{tpu_custom_call.1} parent=1 // pred_check_branch
      %16 = sbr.rel (0) target = $region5
    $region4: #{tpu_custom_call.1} parent=1 // pred_region
      %s18 = ssub.s32 512, 512
      %19 = vsyncadd [#allocation3], %s18
      %s20 = sshll.u32 [#allocation2], 4
      %s21 = int_to_ptr.vmem [resolvable:$true] %s20
      %26 = dma.hbm_to_vmem [thread:$0]  %s0, 512, %s21, [#allocation3], 256, 256, 16
    $region5: #{tpu_custom_call.1} parent=1 // pred_fallthru
      _
    // Predicated region
    $region6: #{tpu_custom_call.1} parent=1 // pred_check
      _
    $region7: #{tpu_custom_call.1} parent=1 // pred_check_branch
      %28 = sbr.rel (0) target = $region9
    $region8: #{tpu_custom_call.1} parent=1 // pred_region
      %s30 = ssub.s32 256, 256
      %31 = vsyncadd [#allocation6], %s30
      %s32 = sshll.u32 [#allocation5], 4
      %s33 = int_to_ptr.vmem [resolvable:$true] %s32
      %38 = dma.hbm_to_vmem [thread:$0]  %s1, 256, %s33, [#allocation6], 128, 128, 8
    $region9: #{tpu_custom_call.1} parent=1 // pred_fallthru
      _
    // Predicated region
    $region10: #{tpu_custom_call.1} parent=1 // pred_check
      _
    $region11: #{tpu_custom_call.1} parent=1 // pred_check_branch
      %40 = sbr.rel (0) target = $region13
    $region12: #{tpu_custom_call.1} parent=1 // pred_region
      %s42 = ssub.s32 12288, 12288
      %43 = vsyncadd [#allocation6], %s42
      %s44 = sshll.u32 [#allocation7], 4
      %s45 = int_to_ptr.vmem [resolvable:$true] %s44
      %50 = dma.hbm_to_vmem [thread:$0]  %s2, 12288, %s45, [#allocation6], 512, 512, 32
    $region13: #{tpu_custom_call.1} parent=1 // pred_fallthru
      _
    // Predicated region
    $region14: #{tpu_custom_call.1} parent=1 // pred_check
      _
    $region15: #{tpu_custom_call.1} parent=1 // pred_check_branch
      %52 = sbr.rel (0) target = $region17
    $region16: #{tpu_custom_call.1} parent=1 // pred_region
      _
    $region17: #{tpu_custom_call.1} parent=1 // pred_fallthru
      _
    // Predicated region
    $region18: #{tpu_custom_call.1} parent=1 // pred_check
      _
    $region19: #{tpu_custom_call.1} parent=1 // pred_check_branch
      %54 = sbr.rel (0) target = $region21
    $region20: #{tpu_custom_call.1} parent=1 // pred_region
      %55 = dma.done [#allocation3], 512
    $region21: #{tpu_custom_call.1} parent=1 // pred_fallthru
      _
    // Predicated region
    $region22: #{tpu_custom_call.1} parent=1 // pred_check
      _
    $region23: #{tpu_custom_call.1} parent=1 // pred_check_branch
      %57 = sbr.rel (0) target = $region25
    $region24: #{tpu_custom_call.1} parent=1 // pred_region
      %58 = dma.done [#allocation6], 256
    $region25: #{tpu_custom_call.1} parent=1 // pred_fallthru
      _
    // Predicated region
    $region26: #{tpu_custom_call.1} parent=1 // pred_check
      _
    $region27: #{tpu_custom_call.1} parent=1 // pred_check_branch
      %60 = sbr.rel (0) target = $region29
    $region28: #{tpu_custom_call.1} parent=1 // pred_region
      %61 = dma.done [#allocation6], 12288
    $region29: #{tpu_custom_call.1} parent=1 // pred_fallthru
      _
    %v62 = vld [vmem:[#allocation2] sm:$0xff]
    %v63 = vld [vmem:[#allocation2 + $0x8] sm:$0xff]
    %v64 = vld [vmem:[#allocation2 + $0x10] sm:$0xff]
    %v65 = vld [vmem:[#allocation2 + $0x18] sm:$0xff]
    %v66 = vld [vmem:[#allocation7] sm:$0xff]
    %v67 = vld [vmem:[#allocation7 + $0x8] sm:$0xff]
    %v68 = vld [vmem:[#allocation7 + $0x10] sm:$0xff]
    %v69 = vld [vmem:[#allocation7 + $0x18] sm:$0xff]
    %v70 = vld [vmem:[#allocation7 + $0x20] sm:$0xff]
    %v71 = vld [vmem:[#allocation7 + $0x28] sm:$0xff]
    %v72 = vld [vmem:[#allocation7 + $0x30] sm:$0xff]
    %v73 = vld [vmem:[#allocation7 + $0x38] sm:$0xff]
    %v74 = vld [vmem:[#allocation7 + $0x40] sm:$0xff]
    %v75 = vld [vmem:[#allocation7 + $0x48] sm:$0xff]
    %v76 = vld [vmem:[#allocation7 + $0x50] sm:$0xff]
    %v77 = vld [vmem:[#allocation7 + $0x58] sm:$0xff]
    %v78 = vld [vmem:[#allocation7 + $0x60] sm:$0xff]
    %v79 = vld [vmem:[#allocation7 + $0x68] sm:$0xff]
    %v80 = vld [vmem:[#allocation7 + $0x70] sm:$0xff]
    %v81 = vld [vmem:[#allocation7 + $0x78] sm:$0xff]
    %v82 = vld [vmem:[#allocation7 + $0x80] sm:$0xff]
    %v83 = vld [vmem:[#allocation7 + $0x88] sm:$0xff]
    %v84 = vld [vmem:[#allocation7 + $0x90] sm:$0xff]
    %v85 = vld [vmem:[#allocation7 + $0x98] sm:$0xff]
    %v86 = vld [vmem:[#allocation7 + $0xa0] sm:$0xff]
    %v87 = vld [vmem:[#allocation7 + $0xa8] sm:$0xff]
    %v88 = vld [vmem:[#allocation7 + $0xb0] sm:$0xff]
    %v89 = vld [vmem:[#allocation7 + $0xb8] sm:$0xff]
    %v90 = vld [vmem:[#allocation7 + $0xc0] sm:$0xff]
    %v91 = vld [vmem:[#allocation7 + $0xc8] sm:$0xff]
    %v92 = vld [vmem:[#allocation7 + $0xd0] sm:$0xff]
    %v93 = vld [vmem:[#allocation7 + $0xd8] sm:$0xff]
    %v94 = vld [vmem:[#allocation7 + $0xe0] sm:$0xff]
    %v95 = vld [vmem:[#allocation7 + $0xe8] sm:$0xff]
    %v96 = vld [vmem:[#allocation7 + $0xf0] sm:$0xff]
    %v97 = vld [vmem:[#allocation7 + $0xf8] sm:$0xff]
    %v98 = vld [vmem:[#allocation7 + $0x100] sm:$0xff]
    %v99 = vld [vmem:[#allocation7 + $0x108] sm:$0xff]
    %v100 = vld [vmem:[#allocation7 + $0x110] sm:$0xff]
    %v101 = vld [vmem:[#allocation7 + $0x118] sm:$0xff]
    %v102 = vld [vmem:[#allocation7 + $0x120] sm:$0xff]
    %v103 = vld [vmem:[#allocation7 + $0x128] sm:$0xff]
    %v104 = vld [vmem:[#allocation7 + $0x130] sm:$0xff]
    %v105 = vld [vmem:[#allocation7 + $0x138] sm:$0xff]
    %v106 = vld [vmem:[#allocation7 + $0x140] sm:$0xff]
    %v107 = vld [vmem:[#allocation7 + $0x148] sm:$0xff]
    %v108 = vld [vmem:[#allocation7 + $0x150] sm:$0xff]
    %v109 = vld [vmem:[#allocation7 + $0x158] sm:$0xff]
    %v110 = vld [vmem:[#allocation7 + $0x160] sm:$0xff]
    %v111 = vld [vmem:[#allocation7 + $0x168] sm:$0xff]
    %v112 = vld [vmem:[#allocation7 + $0x170] sm:$0xff]
    %v113 = vld [vmem:[#allocation7 + $0x178] sm:$0xff]
    %v114 = vld [vmem:[#allocation7 + $0x180] sm:$0xff]
    %v115 = vld [vmem:[#allocation7 + $0x188] sm:$0xff]
    %v116 = vld [vmem:[#allocation7 + $0x190] sm:$0xff]
    %v117 = vld [vmem:[#allocation7 + $0x198] sm:$0xff]
    %v118 = vld [vmem:[#allocation7 + $0x1a0] sm:$0xff]
    %v119 = vld [vmem:[#allocation7 + $0x1a8] sm:$0xff]
    %v120 = vld [vmem:[#allocation7 + $0x1b0] sm:$0xff]
    %v121 = vld [vmem:[#allocation7 + $0x1b8] sm:$0xff]
    %v122 = vld [vmem:[#allocation7 + $0x1c0] sm:$0xff]
    %v123 = vld [vmem:[#allocation7 + $0x1c8] sm:$0xff]
    %v124 = vld [vmem:[#allocation7 + $0x1d0] sm:$0xff]
    %v125 = vld [vmem:[#allocation7 + $0x1d8] sm:$0xff]
    %v126 = vld [vmem:[#allocation7 + $0x1e0] sm:$0xff]
    %v127 = vld [vmem:[#allocation7 + $0x1e8] sm:$0xff]
    %v128 = vld [vmem:[#allocation7 + $0x1f0] sm:$0xff]
    %v129 = vld [vmem:[#allocation7 + $0x1f8] sm:$0xff]
    %v130 = vld [vmem:[#allocation7 + $0x200] sm:$0xff]
    %v131 = vld [vmem:[#allocation7 + $0x208] sm:$0xff]
    %v132 = vld [vmem:[#allocation7 + $0x210] sm:$0xff]
    %v133 = vld [vmem:[#allocation7 + $0x218] sm:$0xff]
    %v134 = vld [vmem:[#allocation7 + $0x220] sm:$0xff]
    %v135 = vld [vmem:[#allocation7 + $0x228] sm:$0xff]
    %v136 = vld [vmem:[#allocation7 + $0x230] sm:$0xff]
    %v137 = vld [vmem:[#allocation7 + $0x238] sm:$0xff]
    %v138 = vld [vmem:[#allocation7 + $0x240] sm:$0xff]
    %v139 = vld [vmem:[#allocation7 + $0x248] sm:$0xff]
    %v140 = vld [vmem:[#allocation7 + $0x250] sm:$0xff]
    %v141 = vld [vmem:[#allocation7 + $0x258] sm:$0xff]
    %v142 = vld [vmem:[#allocation7 + $0x260] sm:$0xff]
    %v143 = vld [vmem:[#allocation7 + $0x268] sm:$0xff]
    %v144 = vld [vmem:[#allocation7 + $0x270] sm:$0xff]
    %v145 = vld [vmem:[#allocation7 + $0x278] sm:$0xff]
    %v146 = vld [vmem:[#allocation7 + $0x280] sm:$0xff]
    %v147 = vld [vmem:[#allocation7 + $0x288] sm:$0xff]
    %v148 = vld [vmem:[#allocation7 + $0x290] sm:$0xff]
    %v149 = vld [vmem:[#allocation7 + $0x298] sm:$0xff]
    %v150 = vld [vmem:[#allocation7 + $0x2a0] sm:$0xff]
    %v151 = vld [vmem:[#allocation7 + $0x2a8] sm:$0xff]
    %v152 = vld [vmem:[#allocation7 + $0x2b0] sm:$0xff]
    %v153 = vld [vmem:[#allocation7 + $0x2b8] sm:$0xff]
    %v154 = vld [vmem:[#allocation7 + $0x2c0] sm:$0xff]
    %v155 = vld [vmem:[#allocation7 + $0x2c8] sm:$0xff]
    %v156 = vld [vmem:[#allocation7 + $0x2d0] sm:$0xff]
    %v157 = vld [vmem:[#allocation7 + $0x2d8] sm:$0xff]
    %v158 = vld [vmem:[#allocation7 + $0x2e0] sm:$0xff]
    %v159 = vld [vmem:[#allocation7 + $0x2e8] sm:$0xff]
    %v160 = vld [vmem:[#allocation7 + $0x2f0] sm:$0xff]
    %v161 = vld [vmem:[#allocation7 + $0x2f8] sm:$0xff]
    %v162 = vld [vmem:[%s3] sm:$0xf]
    %v164 = vlaneseq
    %v165 = vshrl.u32 %v164, 7
    %v166 = vsub.s32 0, %v165
    %v167 = vrot.slane %v162, %v166
    %v168 = vlaneseq
    %v169 = vshrl.u32 %v168, 7
    %v170 = vsub.s32 1, %v169
    %v171 = vrot.slane %v162, %v170
    %v172 = vlaneseq
    %v173 = vshrl.u32 %v172, 7
    %v174 = vsub.s32 2, %v173
    %v175 = vrot.slane %v162, %v174
    %v176 = vlaneseq
    %v177 = vshrl.u32 %v176, 7
    %v178 = vsub.s32 3, %v177
    %v179 = vrot.slane %v162, %v178
    %vm184 = vcmask 523264
    %v186 = vsel %vm184, %v63, 0
    %v189 = vsel %vm184, %v65, 0
    %191 = vmatprep.subr.mxu0 %v67
    %192 = vmatpush1.msra.mxu0 %v66
    %193 = vmatprep.subr.mxu0 %v71
    %194 = vmatpush1.msra.mxu0 %v70
    %195 = vmatprep.subr.mxu0 %v75
    %196 = vmatpush1.msra.mxu0 %v74
    %197 = vmatprep.subr.mxu0 %v79
    %198 = vmatpush1.msra.mxu0 %v78
    %199 = vmatprep.subr.mxu0 %v83
    %200 = vmatpush1.msra.mxu0 %v82
    %201 = vmatprep.subr.mxu0 %v87
    %202 = vmatpush1.msra.mxu0 %v86
    %203 = vmatprep.subr.mxu0 %v91
    %204 = vmatpush1.msra.mxu0 %v90
    %205 = vmatprep.subr.mxu0 %v95
    %206 = vmatpush1.msra.mxu0 %v94
    %207 = vmatprep.subr.mxu0 %v99
    %208 = vmatpush1.msra.mxu0 %v98
    %209 = vmatprep.subr.mxu0 %v103
    %210 = vmatpush1.msra.mxu0 %v102
    %211 = vmatprep.subr.mxu0 %v107
    %212 = vmatpush1.msra.mxu0 %v106
    %213 = vmatprep.subr.mxu0 %v111
    %214 = vmatpush1.msra.mxu0 %v110
    %215 = vmatprep.subr.mxu0 %v115
    %216 = vmatpush1.msra.mxu0 %v114
    %217 = vmatprep.subr.mxu0 %v119
    %218 = vmatpush1.msra.mxu0 %v118
    %219 = vmatprep.subr.mxu0 %v123
    %220 = vmatpush1.msra.mxu0 %v122
    %221 = vmatprep.subr.mxu0 %v127
    %222 = vmatpush1.msra.mxu0 %v126
    %223 = vmatprep.subr.mxu0 %v131
    %224 = vmatpush1.msra.mxu0 %v130
    %225 = vmatprep.subr.mxu0 %v135
    %226 = vmatpush1.msra.mxu0 %v134
    %227 = vmatprep.subr.mxu0 %v139
    %228 = vmatpush1.msra.mxu0 %v138
    %229 = vmatprep.subr.mxu0 %v143
    %230 = vmatpush1.msra.mxu0 %v142
    %231 = vmatprep.subr.mxu0 %v147
    %232 = vmatpush1.msra.mxu0 %v146
    %233 = vmatprep.subr.mxu0 %v151
    %234 = vmatpush1.msra.mxu0 %v150
    %235 = vmatprep.subr.mxu0 %v155
    %236 = vmatpush1.msra.mxu0 %v154
    %237 = vmatprep.subr.mxu0 %v159
    %238 = vmatpush1.msra.mxu0 %v158
    %239 = vmatprep.subr.mxu0 0.0
    %240 = vmatpush1.msra.mxu0 0.0
    %241 = vmatprep.subr.mxu0 0.0
    %242 = vmatpush1.msra.mxu0 0.0
    %243 = vmatprep.subr.mxu0 0.0
    %244 = vmatpush1.msra.mxu0 0.0
    %245 = vmatprep.subr.mxu0 0.0
    %246 = vmatpush1.msra.mxu0 0.0
    %247 = vmatprep.subr.mxu0 0.0
    %248 = vmatpush1.msra.mxu0 0.0
    %249 = vmatprep.subr.mxu0 0.0
    %250 = vmatpush1.msra.mxu0 0.0
    %251 = vmatprep.subr.mxu0 0.0
    %252 = vmatpush1.msra.mxu0 0.0
    %253 = vmatprep.subr.mxu0 0.0
    %254 = vmatpush1.msra.mxu0 0.0
    %255 = vmatprep.mubr.f32.mxu0 %v186
    %256 = vmatmul.mubr.f32.gmra.mrb[0].mxu0 %v62
    %v257 = vpop.f32.mrb[0].mxu0
    %v258 = vadd.f32 %v167, %v257
    %v259 = vpop.f32.mrb[0].mxu0
    %v260 = vadd.f32 %v171, %v259
    %261 = vmatprep.mubr.f32.mxu0 %v189
    %262 = vmatmul.mubr.f32.gmra.mrb[0].mxu0 %v64
    %v263 = vpop.f32.mrb[0].mxu0
    %v264 = vadd.f32 %v167, %v263
    %v265 = vpop.f32.mrb[0].mxu0
    %v266 = vadd.f32 %v171, %v265
    %267 = vdwg.mxu0
    %268 = vmatprep.subr.mxu0 %v69
    %269 = vmatpush1.msra.mxu0 %v68
    %270 = vmatprep.subr.mxu0 %v73
    %271 = vmatpush1.msra.mxu0 %v72
    %272 = vmatprep.subr.mxu0 %v77
    %273 = vmatpush1.msra.mxu0 %v76
    %274 = vmatprep.subr.mxu0 %v81
    %275 = vmatpush1.msra.mxu0 %v80
    %276 = vmatprep.subr.mxu0 %v85
    %277 = vmatpush1.msra.mxu0 %v84
    %278 = vmatprep.subr.mxu0 %v89
    %279 = vmatpush1.msra.mxu0 %v88
    %280 = vmatprep.subr.mxu0 %v93
    %281 = vmatpush1.msra.mxu0 %v92
    %282 = vmatprep.subr.mxu0 %v97
    %283 = vmatpush1.msra.mxu0 %v96
    %284 = vmatprep.subr.mxu0 %v101
    %285 = vmatpush1.msra.mxu0 %v100
    %286 = vmatprep.subr.mxu0 %v105
    %287 = vmatpush1.msra.mxu0 %v104
    %288 = vmatprep.subr.mxu0 %v109
    %289 = vmatpush1.msra.mxu0 %v108
    %290 = vmatprep.subr.mxu0 %v113
    %291 = vmatpush1.msra.mxu0 %v112
    %292 = vmatprep.subr.mxu0 %v117
    %293 = vmatpush1.msra.mxu0 %v116
    %294 = vmatprep.subr.mxu0 %v121
    %295 = vmatpush1.msra.mxu0 %v120
    %296 = vmatprep.subr.mxu0 %v125
    %297 = vmatpush1.msra.mxu0 %v124
    %298 = vmatprep.subr.mxu0 %v129
    %299 = vmatpush1.msra.mxu0 %v128
    %300 = vmatprep.subr.mxu0 %v133
    %301 = vmatpush1.msra.mxu0 %v132
    %302 = vmatprep.subr.mxu0 %v137
    %303 = vmatpush1.msra.mxu0 %v136
    %304 = vmatprep.subr.mxu0 %v141
    %305 = vmatpush1.msra.mxu0 %v140
    %306 = vmatprep.subr.mxu0 %v145
    %307 = vmatpush1.msra.mxu0 %v144
    %308 = vmatprep.subr.mxu0 %v149
    %309 = vmatpush1.msra.mxu0 %v148
    %310 = vmatprep.subr.mxu0 %v153
    %311 = vmatpush1.msra.mxu0 %v152
    %312 = vmatprep.subr.mxu0 %v157
    %313 = vmatpush1.msra.mxu0 %v156
    %314 = vmatprep.subr.mxu0 %v161
    %315 = vmatpush1.msra.mxu0 %v160
    %316 = vmatprep.subr.mxu0 0.0
    %317 = vmatpush1.msra.mxu0 0.0
    %318 = vmatprep.subr.mxu0 0.0
    %319 = vmatpush1.msra.mxu0 0.0
    %320 = vmatprep.subr.mxu0 0.0
    %321 = vmatpush1.msra.mxu0 0.0
    %322 = vmatprep.subr.mxu0 0.0
    %323 = vmatpush1.msra.mxu0 0.0
    %324 = vmatprep.subr.mxu0 0.0
    %325 = vmatpush1.msra.mxu0 0.0
    %326 = vmatprep.subr.mxu0 0.0
    %327 = vmatpush1.msra.mxu0 0.0
    %328 = vmatprep.subr.mxu0 0.0
    %329 = vmatpush1.msra.mxu0 0.0
    %330 = vmatprep.subr.mxu0 0.0
    %331 = vmatpush1.msra.mxu0 0.0
    %332 = vmatprep.mubr.f32.mxu0 %v186
    %333 = vmatmul.mubr.f32.gmra.mrb[0].mxu0 %v62
    %v334 = vpop.f32.mrb[0].mxu0
    %v335 = vadd.f32 %v175, %v334
    %v336 = vpop.f32.mrb[0].mxu0
    %v337 = vadd.f32 %v179, %v336
    %338 = vmatprep.mubr.f32.mxu0 %v189
    %339 = vmatmul.mubr.f32.gmra.mrb[0].mxu0 %v64
    %v340 = vpop.f32.mrb[0].mxu0
    %v341 = vadd.f32 %v175, %v340
    %v342 = vpop.f32.mrb[0].mxu0
    %v343 = vadd.f32 %v179, %v342
    %344 = vdwg.mxu0
    %v345 = vmul.f32 %v258, 0.5
    %v346 = vmul.f32 %v264, 0.5
    %v347 = vtanh.pop %v345
    %v348 = vtanh.pop %v346
    %v349 = vmul.f32 %v347, 0.5
    %v350 = vmul.f32 %v348, 0.5
    %v351 = vadd.f32 %v349, 0.5
    %v352 = vadd.f32 %v350, 0.5
    %v353 = vmul.f32 %v260, 0.5
    %v354 = vmul.f32 %v266, 0.5
    %v355 = vtanh.pop %v353
    %v356 = vtanh.pop %v354
    %v357 = vmul.f32 %v355, 0.5
    %v358 = vmul.f32 %v356, 0.5
    %v359 = vadd.f32 %v357, 0.5
    %v360 = vadd.f32 %v358, 0.5
    %v361 = vtanh.pop %v335
    %v362 = vtanh.pop %v341
    %v363 = vmul.f32 %v337, 0.5
    %v364 = vmul.f32 %v343, 0.5
    %v365 = vtanh.pop %v363
    %v366 = vtanh.pop %v364
    %v367 = vmul.f32 %v365, 0.5
    %v368 = vmul.f32 %v366, 0.5
    %v369 = vadd.f32 %v367, 0.5
    %v370 = vadd.f32 %v368, 0.5
    %v371 = vld [vmem:[#allocation5] sm:$0xff]
    %v372 = vld [vmem:[#allocation5 + $0x8] sm:$0xff]
    %v373 = vmul.f32 %v359, %v371
    %v374 = vmul.f32 %v360, %v372
    %v375 = vmul.f32 %v351, %v361
    %v376 = vmul.f32 %v352, %v362
    %v377 = vadd.f32 %v373, %v375
    %v378 = vadd.f32 %v374, %v376
    %v379 = vtanh.pop %v377
    %v380 = vtanh.pop %v378
    %v381 = vmul.f32 %v369, %v379
    %v382 = vmul.f32 %v370, %v380
    %383 = vst [vmem:[#allocation9] sm:$0xff] %v377
    %384 = vst [vmem:[#allocation9 + $0x8] sm:$0xff] %v378
    %385 = vst [vmem:[#allocation8] sm:$0xff] %v381
    %386 = vst [vmem:[#allocation8 + $0x8] sm:$0xff] %v382
    // Predicated region
    $region30: #{tpu_custom_call.1} parent=1 // pred_check
      _
    $region31: #{tpu_custom_call.1} parent=1 // pred_check_branch
      %388 = sbr.rel (0) target = $region33
    $region32: #{tpu_custom_call.1} parent=1 // pred_region
      %s390 = ssub.s32 256, 256
      %391 = vsyncadd [#allocation4], %s390
      %s392 = sshll.u32 [#allocation8], 4
      %s393 = int_to_ptr.vmem [resolvable:$true] %s392
      %398 = dma.vmem_to_hbm [thread:$0]  %s393, 256, %s4, [#allocation4], 128, 128, 8
    $region33: #{tpu_custom_call.1} parent=1 // pred_fallthru
      _
    // Predicated region
    $region34: #{tpu_custom_call.1} parent=1 // pred_check
      _
    $region35: #{tpu_custom_call.1} parent=1 // pred_check_branch
      %400 = sbr.rel (0) target = $region37
    $region36: #{tpu_custom_call.1} parent=1 // pred_region
      %s402 = ssub.s32 256, 256
      %403 = vsyncadd [#allocation10], %s402
      %s404 = sshll.u32 [#allocation9], 4
      %s405 = int_to_ptr.vmem [resolvable:$true] %s404
      %410 = dma.vmem_to_hbm [thread:$0]  %s405, 256, %s5, [#allocation10], 128, 128, 8
    $region37: #{tpu_custom_call.1} parent=1 // pred_fallthru
      _
    // Predicated region
    $region38: #{tpu_custom_call.1} parent=1 // pred_check
      _
    $region39: #{tpu_custom_call.1} parent=1 // pred_check_branch
      %412 = sbr.rel (0) target = $region41
    $region40: #{tpu_custom_call.1} parent=1 // pred_region
      %413 = dma.done [#allocation4], 256
    $region41: #{tpu_custom_call.1} parent=1 // pred_fallthru
      _
    // Predicated region
    $region42: #{tpu_custom_call.1} parent=1 // pred_check
      _
    $region43: #{tpu_custom_call.1} parent=1 // pred_check_branch
      %415 = sbr.rel (0) target = $region45
    $region44: #{tpu_custom_call.1} parent=1 // pred_region
      %416 = dma.done [#allocation10], 256
    $region45: #{tpu_custom_call.1} parent=1 // pred_fallthru
      _
    %417 = vsyncpa [#allocation3], 1
    %418 = vsyncpa [#allocation6], 1
    %419 = vsyncpa [#allocation4], 1
    %420 = vsyncpa [#allocation10], 1

</llo_original>
